<compile_context>
chip_gen: v6e
topology: v6e:2x2x1
jax: 0.10.0
libtpu: 0.0.40
codegen_flags: <defaults>
</compile_context>

<pallas_src>
import jax
import jax.numpy as jnp
from jax import lax
from jax.experimental import pallas as pl
from jax.experimental.pallas import tpu as pltpu

_INV_SQRT2 = 0.7071067811865476


def mlp_kernel(x_ref, w1_ref, b1_ref, w2_ref, b2_ref, o_ref, acc_ref):
    # x_ref:   (tm, C_in)
    # w1_ref:  (C_in, th)     slice of fc1 weight (already transposed)
    # b1_ref:  (1, th)        slice of fc1 bias
    # w2_ref:  (th, C_out)    slice of fc2 weight (already transposed)
    # b2_ref:  (1, C_out)
    # o_ref:   (tm, C_out)    resident across the hidden-axis grid dim
    # acc_ref: (tm, C_out)    f32 accumulator scratch
    h_idx = pl.program_id(1)

    @pl.when(h_idx == 0)
    def _():
        acc_ref[...] = jnp.zeros_like(acc_ref)

    # fc1 on this hidden-dim slice: native-dtype MXU matmul, f32 accumulate.
    h = jnp.dot(x_ref[...], w1_ref[...], preferred_element_type=jnp.float32)
    h = h + b1_ref[...].astype(jnp.float32)

    # exact (erf) GELU — matches torch.nn.GELU default.
    h = 0.5 * h * (1.0 + lax.erf(h * _INV_SQRT2))

    # dropout(p=0.0) is identity  # TODO(synk): nonzero dropout would need pltpu PRNG

    # fc2 partial product for this hidden slice, accumulated in f32.
    acc_ref[...] += jnp.dot(h.astype(w2_ref.dtype), w2_ref[...],
                            preferred_element_type=jnp.float32)

    @pl.when(h_idx == pl.num_programs(1) - 1)
    def _():
        o_ref[...] = (acc_ref[...] + b2_ref[...].astype(jnp.float32)).astype(o_ref.dtype)


def _round_up(x, m):
    return ((x + m - 1) // m) * m


def mlp_pallas(x, w1, b1, w2, b2, *, tm=256, th=512):
    """x: [B, N, C_in].  w1: [H, C_in], b1: [H], w2: [C_out, H], b2: [C_out]
    (PyTorch nn.Linear parameter conventions)."""
    B, N, C_in = x.shape
    H = w1.shape[0]
    C_out = w2.shape[0]
    M = B * N
    x2d = x.reshape(M, C_in)

    # Pre-transpose weights so the kernel does plain row-major matmuls.
    w1_t = w1.T            # (C_in, H)
    w2_t = w2.T            # (H, C_out)

    # --- tile sizing & padding ------------------------------------------
    # Rows: large tile for MXU utilization; cdiv + zero-pad the remainder.
    tm_eff = min(tm, _round_up(M, 8))
    M_pad = _round_up(M, tm_eff)

    # Hidden axis: single full-size tile if it fits, otherwise 128-aligned
    # tiles so resident weight slices stay bounded (VMEM budget on v7x/v5e).
    if H <= th:
        th_eff, H_pad = H, H
    else:
        th_eff = _round_up(th, 128)
        H_pad = _round_up(H, th_eff)

    # Lane-dense output: pad C_out to a multiple of 128 (avoids masked vst).
    C_out_pad = _round_up(C_out, 128)

    if M_pad != M:
        x2d = jnp.pad(x2d, ((0, M_pad - M), (0, 0)))
    if H_pad != H:
        w1_t = jnp.pad(w1_t, ((0, 0), (0, H_pad - H)))
        b1 = jnp.pad(b1, (0, H_pad - H))
        w2_t = jnp.pad(w2_t, ((0, H_pad - H), (0, 0)))
    if C_out_pad != C_out:
        w2_t = jnp.pad(w2_t, ((0, 0), (0, C_out_pad - C_out)))
        b2 = jnp.pad(b2, (0, C_out_pad - C_out))

    b1_2d = b1.reshape(1, H_pad)
    b2_2d = b2.reshape(1, C_out_pad)

    grid = (M_pad // tm_eff, H_pad // th_eff)

    # --- VMEM budget (double-buffered blocks + scratch + intermediate) ---
    x_isz = x.dtype.itemsize
    w_isz = w1_t.dtype.itemsize
    per_step_bytes = (tm_eff * C_in * x_isz
                      + C_in * th_eff * w_isz
                      + th_eff * w_isz
                      + th_eff * C_out_pad * w_isz
                      + C_out_pad * w_isz
                      + tm_eff * C_out_pad * x_isz)
    vmem_needed = (2 * per_step_bytes
                   + tm_eff * C_out_pad * 4      # f32 accumulator scratch
                   + tm_eff * th_eff * 4)        # f32 intermediate h
    vmem_limit = max(32 * 1024 * 1024,
                     min(int(1.5 * vmem_needed) + (4 << 20), 128 * 1024 * 1024))

    cost = pl.CostEstimate(
        flops=2 * M_pad * (C_in * H_pad + H_pad * C_out_pad),
        transcendentals=M_pad * H_pad,
        bytes_accessed=(M_pad * C_in * x_isz
                        + C_in * H_pad * w_isz
                        + H_pad * C_out_pad * w_isz
                        + M_pad * C_out_pad * x_isz),
    )

    out2d = pl.pallas_call(
        mlp_kernel,
        out_shape=jax.ShapeDtypeStruct((M_pad, C_out_pad), x.dtype),
        grid_spec=pltpu.PrefetchScalarGridSpec(
            num_scalar_prefetch=0,
            grid=grid,
            in_specs=[
                pl.BlockSpec((tm_eff, C_in), lambda i, h: (i, 0)),
                pl.BlockSpec((C_in, th_eff), lambda i, h: (0, h)),
                pl.BlockSpec((1, th_eff), lambda i, h: (0, h)),
                pl.BlockSpec((th_eff, C_out_pad), lambda i, h: (h, 0)),
                pl.BlockSpec((1, C_out_pad), lambda i, h: (0, 0)),
            ],
            out_specs=pl.BlockSpec((tm_eff, C_out_pad), lambda i, h: (i, 0)),
            scratch_shapes=[pltpu.VMEM((tm_eff, C_out_pad), jnp.float32)],
        ),
        compiler_params=pltpu.CompilerParams(
            dimension_semantics=("parallel", "arbitrary"),
            vmem_limit_bytes=vmem_limit,
        ),
        cost_estimate=cost,
    )(x2d, w1_t, b1_2d, w2_t, b2_2d)

    return out2d[:M, :C_out].reshape(B, N, C_out)


def mlp_reference(x, w1, b1, w2, b2):
    h = jnp.einsum("bnc,hc->bnh", x, w1) + b1
    h = 0.5 * h * (1.0 + lax.erf(h / jnp.sqrt(2.0)))
    return jnp.einsum("bnh,oh->bno", h, w2) + b2


if __name__ == "__main__":
    key = jax.random.PRNGKey(0)
    B, N = 2, 8
    in_features = 32
    hidden_features = 64
    out_features = 32

    k_x, k_w1, k_b1, k_w2, k_b2 = jax.random.split(key, 5)
    x = jax.random.normal(k_x, (B, N, in_features), dtype=jnp.float32)

    # Deterministic parameter init (uniform like torch Linear default, scaled).
    bound1 = 1.0 / (in_features ** 0.5)
    bound2 = 1.0 / (hidden_features ** 0.5)
    w1 = jax.random.uniform(k_w1, (hidden_features, in_features),
                            minval=-bound1, maxval=bound1, dtype=jnp.float32)
    b1 = jax.random.uniform(k_b1, (hidden_features,),
                            minval=-bound1, maxval=bound1, dtype=jnp.float32)
    w2 = jax.random.uniform(k_w2, (out_features, hidden_features),
                            minval=-bound2, maxval=bound2, dtype=jnp.float32)
    b2 = jax.random.uniform(k_b2, (out_features,),
                            minval=-bound2, maxval=bound2, dtype=jnp.float32)

    out = mlp_pallas(x, w1, b1, w2, b2)
    out = jax.block_until_ready(out)

    ref = mlp_reference(x, w1, b1, w2, b2)
    assert out.shape == (B, N, out_features)
    assert jnp.allclose(out, ref, atol=1e-5, rtol=1e-5)

    print("KERNEL_OK")
</pallas_src>

<mosaic_0001>
module attributes {stable_mosaic.version = 11 : i64} {
  func.func @mlp_kernel(%arg0: i32, %arg1: i32, %arg2: memref<16x32xf32, #tpu.memory_space<vmem>>, %arg3: memref<32x64xf32, #tpu.memory_space<vmem>>, %arg4: memref<1x64xf32, #tpu.memory_space<vmem>>, %arg5: memref<64x128xf32, #tpu.memory_space<vmem>>, %arg6: memref<1x128xf32, #tpu.memory_space<vmem>>, %arg7: memref<16x128xf32, #tpu.memory_space<vmem>>, %arg8: memref<16x128xf32, #tpu.memory_space<vmem>>) attributes {dimension_semantics = [#tpu.dimension_semantics<parallel>, #tpu.dimension_semantics<arbitrary>], iteration_bounds = array<i64: 1, 1>, scalar_prefetch = 0 : i64, scratch_operands = 1 : i64, tpu.core_type = #tpu.core_type<tc>, window_params = [{transform_indices = @transform_0, window_bounds = array<i64: 16, 32>}, {transform_indices = @transform_1, window_bounds = array<i64: 32, 64>}, {transform_indices = @transform_2, window_bounds = array<i64: 1, 64>}, {transform_indices = @transform_3, window_bounds = array<i64: 64, 128>}, {pipeline_mode = #tpu.pipeline_mode<synchronous>, transform_indices = @transform_4, window_bounds = array<i64: 1, 128>}, {transform_indices = @transform_5, window_bounds = array<i64: 16, 128>}]} {
    %c0_i32 = arith.constant 0 : i32
    %0 = arith.cmpi eq, %arg1, %c0_i32 : i32
    %1 = arith.extui %0 : i1 to i32
    %c0_i32_0 = arith.constant 0 : i32
    %2 = arith.cmpi ne, %1, %c0_i32_0 : i32
    scf.if %2 {
      %cst_18 = arith.constant 0.000000e+00 : f32
      %25 = vector.broadcast %cst_18 : f32 to vector<16x128xf32>
      %c0_19 = arith.constant 0 : index
      %c0_20 = arith.constant 0 : index
      %26 = vector.load %arg8[%c0_19, %c0_20] : memref<16x128xf32, #tpu.memory_space<vmem>>, vector<16x128xf32>
      tpu.vector_store %arg8[%c0_19, %c0_20], %25 {strides = array<i32>} : memref<16x128xf32, #tpu.memory_space<vmem>>, vector<16x128xf32>,
    } else {
    }
    %c0 = arith.constant 0 : index
    %c0_1 = arith.constant 0 : index
    %3 = vector.load %arg2[%c0, %c0_1] : memref<16x32xf32, #tpu.memory_space<vmem>>, vector<16x32xf32>
    %c0_2 = arith.constant 0 : index
    %c0_3 = arith.constant 0 : index
    %4 = vector.load %arg3[%c0_2, %c0_3] : memref<32x64xf32, #tpu.memory_space<vmem>>, vector<32x64xf32>
    %cst = arith.constant dense<0.000000e+00> : vector<16x64xf32>
    %5 = tpu.matmul %3, %4, %cst {dimension_numbers = #tpu.dot_dimension_numbers<[1], [0], [0], [1], [0, 0, 1, 1], [], []>} : vector<16x32xf32>, vector<32x64xf32>, vector<16x64xf32> -> vector<16x64xf32>
    %c0_4 = arith.constant 0 : index
    %c0_5 = arith.constant 0 : index
    %6 = vector.load %arg4[%c0_4, %c0_5] : memref<1x64xf32, #tpu.memory_space<vmem>>, vector<1x64xf32>
    %7 = vector.broadcast %6 : vector<1x64xf32> to vector<16x64xf32>
    %8 = arith.addf %5, %7 : vector<16x64xf32>
    %cst_6 = arith.constant 5.000000e-01 : f32
    %9 = vector.broadcast %cst_6 : f32 to vector<16x64xf32>
    %10 = arith.mulf %9, %8 : vector<16x64xf32>
    %cst_7 = arith.constant 0.707106769 : f32
    %11 = vector.broadcast %cst_7 : f32 to vector<16x64xf32>
    %12 = arith.mulf %8, %11 : vector<16x64xf32>
    %13 = math.erf %12 : vector<16x64xf32>
    %cst_8 = arith.constant 1.000000e+00 : f32
    %14 = vector.broadcast %cst_8 : f32 to vector<16x64xf32>
    %15 = arith.addf %14, %13 : vector<16x64xf32>
    %16 = arith.mulf %10, %15 : vector<16x64xf32>
    %c0_9 = arith.constant 0 : index
    %c0_10 = arith.constant 0 : index
    %17 = vector.load %arg8[%c0_9, %c0_10] : memref<16x128xf32, #tpu.memory_space<vmem>>, vector<16x128xf32>
    %c0_11 = arith.constant 0 : index
    %c0_12 = arith.constant 0 : index
    %18 = vector.load %arg5[%c0_11, %c0_12] : memref<64x128xf32, #tpu.memory_space<vmem>>, vector<64x128xf32>
    %cst_13 = arith.constant dense<0.000000e+00> : vector<16x128xf32>
    %19 = tpu.matmul %16, %18, %cst_13 {dimension_numbers = #tpu.dot_dimension_numbers<[1], [0], [0], [1], [0, 0, 1, 1], [], []>} : vector<16x64xf32>, vector<64x128xf32>, vector<16x128xf32> -> vector<16x128xf32>
    %20 = arith.addf %17, %19 : vector<16x128xf32>
    %c0_14 = arith.constant 0 : index
    %c0_15 = arith.constant 0 : index
    %21 = vector.load %arg8[%c0_14, %c0_15] : memref<16x128xf32, #tpu.memory_space<vmem>>, vector<16x128xf32>
    tpu.vector_store %arg8[%c0_14, %c0_15], %20 {strides = array<i32>} : memref<16x128xf32, #tpu.memory_space<vmem>>, vector<16x128xf32>,
    %c0_i32_16 = arith.constant 0 : i32
    %22 = arith.cmpi eq, %arg1, %c0_i32_16 : i32
    %23 = arith.extui %22 : i1 to i32
    %c0_i32_17 = arith.constant 0 : i32
    %24 = arith.cmpi ne, %23, %c0_i32_17 : i32
    scf.if %24 {
      %c0_18 = arith.constant 0 : index
      %c0_19 = arith.constant 0 : index
      %25 = vector.load %arg8[%c0_18, %c0_19] : memref<16x128xf32, #tpu.memory_space<vmem>>, vector<16x128xf32>
      %c0_20 = arith.constant 0 : index
      %c0_21 = arith.constant 0 : index
      %26 = vector.load %arg6[%c0_20, %c0_21] : memref<1x128xf32, #tpu.memory_space<vmem>>, vector<1x128xf32>
      %27 = vector.broadcast %26 : vector<1x128xf32> to vector<16x128xf32>
      %28 = arith.addf %25, %27 : vector<16x128xf32>
      %c0_22 = arith.constant 0 : index
      %c0_23 = arith.constant 0 : index
      %29 = vector.load %arg7[%c0_22, %c0_23] : memref<16x128xf32, #tpu.memory_space<vmem>>, vector<16x128xf32>
      tpu.vector_store %arg7[%c0_22, %c0_23], %28 {strides = array<i32>} : memref<16x128xf32, #tpu.memory_space<vmem>>, vector<16x128xf32>,
    } else {
    }
    return
  }
  func.func @transform_0(%arg0: i32, %arg1: i32) -> (i32, i32) {
    %c0_i32 = arith.constant 0 : i32
    %c0_i32_0 = arith.constant 0 : i32
    return %arg0, %c0_i32 : i32, i32
  }
  func.func @transform_1(%arg0: i32, %arg1: i32) -> (i32, i32) {
    %c0_i32 = arith.constant 0 : i32
    %c0_i32_0 = arith.constant 0 : i32
    return %c0_i32, %arg1 : i32, i32
  }
  func.func @transform_2(%arg0: i32, %arg1: i32) -> (i32, i32) {
    %c0_i32 = arith.constant 0 : i32
    %c0_i32_0 = arith.constant 0 : i32
    return %c0_i32, %arg1 : i32, i32
  }
  func.func @transform_3(%arg0: i32, %arg1: i32) -> (i32, i32) {
    %c0_i32 = arith.constant 0 : i32
    %c0_i32_0 = arith.constant 0 : i32
    return %arg1, %c0_i32 : i32, i32
  }
  func.func @transform_4(%arg0: i32, %arg1: i32) -> (i32, i32) {
    %c0_i32 = arith.constant 0 : i32
    %c0_i32_0 = arith.constant 0 : i32
    %c0_i32_1 = arith.constant 0 : i32
    return %c0_i32, %c0_i32_0 : i32, i32
  }
  func.func @transform_5(%arg0: i32, %arg1: i32) -> (i32, i32) {
    %c0_i32 = arith.constant 0 : i32
    %c0_i32_0 = arith.constant 0 : i32
    return %arg0, %c0_i32 : i32, i32
  }
}

</mosaic_0001>

<llo_original>
// kernel: tpu_custom_call.1
$region0: #{tpu_custom_call.1}
  #allocation0 [shape = 'u32[]', space=smem, size = 0x4, offset = 0x4, fixed_abs, tag = 'smem constant byte address 0x4 - core index']
  #allocation1 [shape = 'u32[144,128]{1,0:T(1,128)}', space=vmem, size = 0x12000, scoped, tag = 'internal scratch']
  #allocation2 [shape = 'f32[16,128]{1,0:T(8,128)}', space=vmem, size = 0x2000, scoped, tag = 'scratch operand']
  %s0 = inlined_call_operand.hbm [shape: f32[16,32], index: 0, kind: input, shape index: {}]
  %s1 = inlined_call_operand.hbm [shape: f32[32,64], index: 1, kind: input, shape index: {}]
  %s2 = inlined_call_operand.vmem [shape: f32[1,64], index: 2, kind: input, shape index: {}]
  %s3 = inlined_call_operand.hbm [shape: f32[64,128], index: 3, kind: input, shape index: {}]
  %s4 = inlined_call_operand.vmem [shape: f32[1,128], index: 4, kind: input, shape index: {}]
  %s5 = inlined_call_operand.hbm [shape: f32[16,128], index: 5, kind: output, shape index: {}]
  %s6 = sld [smem:[#allocation0]]
  $region50: #{tpu_custom_call.1} parent=0
    _
  %s8 = ssub.s32 1, %s6
  %s9 = scalar_select 0, %s8, %s6
  $region1: #{tpu_custom_call.1} parent=0
    #allocation3 [shape = 'u8[8192]{0}', space=vmem, size = 0x2000, scoped, tag = 'input window, operand 0, single buffered']
    #allocation4 [shape = 's32[1]{0}', space=sflag, size = 0x4, scoped, tag = 'scoped memory for tpu_custom_call.1']
    #allocation5 [shape = 's32[1]{0}', space=sflag, size = 0x4, scoped, tag = 'scoped memory for tpu_custom_call.1']
    #allocation6 [shape = 'u8[16384]{0}', space=vmem, size = 0x4000, scoped, tag = 'input window, operand 1, single buffered']
    #allocation7 [shape = 's32[1]{0}', space=sflag, size = 0x4, scoped, tag = 'scoped memory for tpu_custom_call.1']
    #allocation8 [shape = 'u8[32768]{0}', space=vmem, size = 0x8000, scoped, tag = 'input window, operand 3, single buffered']
    #allocation9 [shape = 'u8[8192]{0}', space=vmem, size = 0x2000, scoped, tag = 'output window, operand 0, single buffered']
    %10 = vsyncpa [#allocation4], 0
    %11 = vsyncpa [#allocation7], 0
    %12 = vsyncpa [#allocation5], 0
    // Predicated region
    $region2: #{tpu_custom_call.1} parent=1 // pred_check
      _
    $region3: #{tpu_custom_call.1} parent=1 // pred_check_branch
      %14 = sbr.rel (0) target = $region5
    $region4: #{tpu_custom_call.1} parent=1 // pred_region
      %s16 = ssub.s32 256, 256
      %17 = vsyncadd [#allocation4], %s16
      %s18 = sshll.u32 [#allocation3], 4
      %s19 = int_to_ptr.vmem [resolvable:$true] %s18
      %24 = dma.hbm_to_vmem [thread:$0]  %s0, 256, %s19, [#allocation4], 128, 128, 8
    $region5: #{tpu_custom_call.1} parent=1 // pred_fallthru
      _
    // Predicated region
    $region6: #{tpu_custom_call.1} parent=1 // pred_check
      _
    $region7: #{tpu_custom_call.1} parent=1 // pred_check_branch
      %26 = sbr.rel (0) target = $region9
    $region8: #{tpu_custom_call.1} parent=1 // pred_region
      %s28 = ssub.s32 512, 512
      %29 = vsyncadd [#allocation7], %s28
      %s30 = sshll.u32 [#allocation6], 4
      %s31 = int_to_ptr.vmem [resolvable:$true] %s30
      %36 = dma.hbm_to_vmem [thread:$0]  %s1, 512, %s31, [#allocation7], 128, 128, 8
    $region9: #{tpu_custom_call.1} parent=1 // pred_fallthru
      _
    // Predicated region
    $region10: #{tpu_custom_call.1} parent=1 // pred_check
      _
    $region11: #{tpu_custom_call.1} parent=1 // pred_check_branch
      %38 = sbr.rel (0) target = $region13
    $region12: #{tpu_custom_call.1} parent=1 // pred_region
      _
    $region13: #{tpu_custom_call.1} parent=1 // pred_fallthru
      _
    // Predicated region
    $region14: #{tpu_custom_call.1} parent=1 // pred_check
      _
    $region15: #{tpu_custom_call.1} parent=1 // pred_check_branch
      %40 = sbr.rel (0) target = $region17
    $region16: #{tpu_custom_call.1} parent=1 // pred_region
      %s42 = ssub.s32 1024, 1024
      %43 = vsyncadd [#allocation7], %s42
      %s44 = sshll.u32 [#allocation8], 4
      %s45 = int_to_ptr.vmem [resolvable:$true] %s44
      %50 = dma.hbm_to_vmem [thread:$0]  %s3, 1024, %s45, [#allocation7], 128, 128, 8
    $region17: #{tpu_custom_call.1} parent=1 // pred_fallthru
      _
    // Predicated region
    $region18: #{tpu_custom_call.1} parent=1 // pred_check
      _
    $region19: #{tpu_custom_call.1} parent=1 // pred_check_branch
      %52 = sbr.rel (0) target = $region21
    $region20: #{tpu_custom_call.1} parent=1 // pred_region
      _
    $region21: #{tpu_custom_call.1} parent=1 // pred_fallthru
      _
    // Predicated region
    $region22: #{tpu_custom_call.1} parent=1 // pred_check
      _
    $region23: #{tpu_custom_call.1} parent=1 // pred_check_branch
      %54 = sbr.rel (0) target = $region25
    $region24: #{tpu_custom_call.1} parent=1 // pred_region
      %55 = dma.done [#allocation4], 256
    $region25: #{tpu_custom_call.1} parent=1 // pred_fallthru
      _
    // Predicated region
    $region26: #{tpu_custom_call.1} parent=1 // pred_check
      _
    $region27: #{tpu_custom_call.1} parent=1 // pred_check_branch
      %57 = sbr.rel (0) target = $region29
    $region28: #{tpu_custom_call.1} parent=1 // pred_region
      %58 = dma.done [#allocation7], 512
    $region29: #{tpu_custom_call.1} parent=1 // pred_fallthru
      _
    // Predicated region
    $region30: #{tpu_custom_call.1} parent=1 // pred_check
      _
    $region31: #{tpu_custom_call.1} parent=1 // pred_check_branch
      %60 = sbr.rel (0) target = $region33
    $region32: #{tpu_custom_call.1} parent=1 // pred_region
      %61 = dma.done [#allocation7], 1024
    $region33: #{tpu_custom_call.1} parent=1 // pred_fallthru
      _
    %p62 = scmp.eq.s32.totalorder 0, 0
    // Predicated region
    $region34: #{tpu_custom_call.1} parent=1 // pred_check
      %p63 = pneg %p62
    $region35: #{tpu_custom_call.1} parent=1 // pred_check_branch
      %65 = sbr.rel (%p63) target = $region37
    $region36: #{tpu_custom_call.1} parent=1 // pred_region
      %66 = vst [vmem:[#allocation2] sm:$0xff] 0.0
      %67 = vst [vmem:[#allocation2 + $0x8] sm:$0xff] 0.0
    $region37: #{tpu_custom_call.1} parent=1 // pred_fallthru
      _
    %v68 = vld [vmem:[#allocation3] sm:$0xff]
    %v69 = vld [vmem:[#allocation3 + $0x8] sm:$0xff]
    %v70 = vld [vmem:[#allocation6] sm:$0xff]
    %v71 = vld [vmem:[#allocation6 + $0x8] sm:$0xff]
    %v72 = vld [vmem:[#allocation6 + $0x10] sm:$0xff]
    %v73 = vld [vmem:[#allocation6 + $0x18] sm:$0xff]
    %v74 = vld [vmem:[%s2] sm:$0x1]
    %v76 = vlaneseq
    %v77 = vshrl.u32 %v76, 7
    %v78 = vsub.s32 0, %v77
    %v79 = vrot.slane %v74, %v78
    %vm81 = vcmask 261120
    %v83 = vsel %vm81, %v68, 0
    %v86 = vsel %vm81, %v69, 0
    %88 = vmatprep.subr.mxu0 0.0
    %89 = vmatpush1.msra.mxu0 0.0
    %90 = vmatprep.subr.mxu0 0.0
    %91 = vmatpush1.msra.mxu0 0.0
    %92 = vmatprep.subr.mxu0 0.0
    %93 = vmatpush1.msra.mxu0 0.0
    %94 = vmatprep.subr.mxu0 0.0
    %95 = vmatpush1.msra.mxu0 0.0
    %96 = vmatprep.subr.mxu0 0.0
    %97 = vmatpush1.msra.mxu0 0.0
    %98 = vmatprep.subr.mxu0 0.0
    %99 = vmatpush1.msra.mxu0 0.0
    %100 = vmatprep.subr.mxu0 0.0
    %101 = vmatpush1.msra.mxu0 0.0
    %102 = vmatprep.subr.mxu0 0.0
    %103 = vmatpush1.msra.mxu0 0.0
    %104 = vmatprep.subr.mxu0 0.0
    %105 = vmatpush1.msra.mxu0 0.0
    %106 = vmatprep.subr.mxu0 0.0
    %107 = vmatpush1.msra.mxu0 0.0
    %108 = vmatprep.subr.mxu0 0.0
    %109 = vmatpush1.msra.mxu0 0.0
    %110 = vmatprep.subr.mxu0 0.0
    %111 = vmatpush1.msra.mxu0 0.0
    %112 = vmatprep.subr.mxu0 0.0
    %113 = vmatpush1.msra.mxu0 %v73
    %114 = vmatprep.subr.mxu0 0.0
    %115 = vmatpush1.msra.mxu0 %v72
    %116 = vmatprep.subr.mxu0 0.0
    %117 = vmatpush1.msra.mxu0 %v71
    %118 = vmatprep.subr.mxu0 0.0
    %119 = vmatpush1.msra.mxu0 %v70
    %120 = vmatprep.subr.mxu0 0.0
    %121 = vmatpush2.msra.mxu0 0.0
    %122 = vmatprep.subr.mxu0 0.0
    %123 = vmatpush2.msra.mxu0 0.0
    %124 = vmatprep.subr.mxu0 0.0
    %125 = vmatpush2.msra.mxu0 0.0
    %126 = vmatprep.subr.mxu0 0.0
    %127 = vmatpush2.msra.mxu0 0.0
    %128 = vmatprep.subr.mxu0 0.0
    %129 = vmatpush2.msra.mxu0 0.0
    %130 = vmatprep.subr.mxu0 0.0
    %131 = vmatpush2.msra.mxu0 0.0
    %132 = vmatprep.subr.mxu0 0.0
    %133 = vmatpush2.msra.mxu0 0.0
    %134 = vmatprep.subr.mxu0 0.0
    %135 = vmatpush2.msra.mxu0 0.0
    %136 = vmatprep.subr.mxu0 0.0
    %137 = vmatpush2.msra.mxu0 0.0
    %138 = vmatprep.subr.mxu0 0.0
    %139 = vmatpush2.msra.mxu0 0.0
    %140 = vmatprep.subr.mxu0 0.0
    %141 = vmatpush2.msra.mxu0 0.0
    %142 = vmatprep.subr.mxu0 0.0
    %143 = vmatpush2.msra.mxu0 0.0
    %144 = vmatprep.subr.mxu0 0.0
    %145 = vmatpush2.msra.mxu0 0.0
    %146 = vmatprep.subr.mxu0 0.0
    %147 = vmatpush2.msra.mxu0 0.0
    %148 = vmatprep.subr.mxu0 0.0
    %149 = vmatpush2.msra.mxu0 0.0
    %150 = vmatprep.subr.mxu0 0.0
    %151 = vmatpush2.msra.mxu0 0.0
    %152 = vmatprep.mubr.f32.mxu0 0.0
    %153 = vmatmul.mubr.f32.gmra.mxu0 %v83
    %v154 = vpop.f32.mrf.mxu0
    %v155 = vadd.f32 %v79, %v154
    %v156 = vpop.f32.mrf.mxu0
    %157 = vmatprep.mubr.f32.mxu0 0.0
    %158 = vmatmul.mubr.f32.gmra.mxu0 %v86
    %v159 = vpop.f32.mrf.mxu0
    %v160 = vadd.f32 %v79, %v159
    %v161 = vpop.f32.mrf.mxu0
    %162 = vdwg.mxu0
    %v163 = vmul.f32 %v155, 0.5
    %v164 = vmul.f32 %v160, 0.5
    %v165 = vmul.f32 %v155, 0.70710677
    %v166 = vmul.f32 %v160, 0.70710677
    %v167 = verf.f32.pop %v165
    %v168 = verf.f32.pop %v166
    %v169 = vadd.f32 %v167, 1.0
    %v170 = vadd.f32 %v168, 1.0
    %v171 = vmul.f32 %v163, %v169
    %v172 = vmul.f32 %v164, %v170
    %v173 = vld [vmem:[#allocation2] sm:$0xff]
    %v174 = vld [vmem:[#allocation2 + $0x8] sm:$0xff]
    %v175 = vld [vmem:[#allocation8] sm:$0xff]
    %v176 = vld [vmem:[#allocation8 + $0x8] sm:$0xff]
    %v177 = vld [vmem:[#allocation8 + $0x10] sm:$0xff]
    %v178 = vld [vmem:[#allocation8 + $0x18] sm:$0xff]
    %v179 = vld [vmem:[#allocation8 + $0x20] sm:$0xff]
    %v180 = vld [vmem:[#allocation8 + $0x28] sm:$0xff]
    %v181 = vld [vmem:[#allocation8 + $0x30] sm:$0xff]
    %v182 = vld [vmem:[#allocation8 + $0x38] sm:$0xff]
    %vm183 = vcmask 523264
    %v185 = vsel %vm183, %v171, 0
    %v188 = vsel %vm183, %v172, 0
    %190 = vmatprep.subr.mxu0 0.0
    %191 = vmatpush1.msra.mxu0 0.0
    %192 = vmatprep.subr.mxu0 0.0
    %193 = vmatpush1.msra.mxu0 0.0
    %194 = vmatprep.subr.mxu0 0.0
    %195 = vmatpush1.msra.mxu0 0.0
    %196 = vmatprep.subr.mxu0 0.0
    %197 = vmatpush1.msra.mxu0 0.0
    %198 = vmatprep.subr.mxu0 0.0
    %199 = vmatpush1.msra.mxu0 0.0
    %200 = vmatprep.subr.mxu0 0.0
    %201 = vmatpush1.msra.mxu0 0.0
    %202 = vmatprep.subr.mxu0 0.0
    %203 = vmatpush1.msra.mxu0 0.0
    %204 = vmatprep.subr.mxu0 0.0
    %205 = vmatpush1.msra.mxu0 0.0
    %206 = vmatprep.subr.mxu0 0.0
    %207 = vmatpush1.msra.mxu0 %v182
    %208 = vmatprep.subr.mxu0 0.0
    %209 = vmatpush1.msra.mxu0 %v181
    %210 = vmatprep.subr.mxu0 0.0
    %211 = vmatpush1.msra.mxu0 %v180
    %212 = vmatprep.subr.mxu0 0.0
    %213 = vmatpush1.msra.mxu0 %v179
    %214 = vmatprep.subr.mxu0 0.0
    %215 = vmatpush1.msra.mxu0 %v178
    %216 = vmatprep.subr.mxu0 0.0
    %217 = vmatpush1.msra.mxu0 %v177
    %218 = vmatprep.subr.mxu0 0.0
    %219 = vmatpush1.msra.mxu0 %v176
    %220 = vmatprep.subr.mxu0 0.0
    %221 = vmatpush1.msra.mxu0 %v175
    %222 = vmatprep.subr.mxu0 0.0
    %223 = vmatpush2.msra.mxu0 0.0
    %224 = vmatprep.subr.mxu0 0.0
    %225 = vmatpush2.msra.mxu0 0.0
    %226 = vmatprep.subr.mxu0 0.0
    %227 = vmatpush2.msra.mxu0 0.0
    %228 = vmatprep.subr.mxu0 0.0
    %229 = vmatpush2.msra.mxu0 0.0
    %230 = vmatprep.subr.mxu0 0.0
    %231 = vmatpush2.msra.mxu0 0.0
    %232 = vmatprep.subr.mxu0 0.0
    %233 = vmatpush2.msra.mxu0 0.0
    %234 = vmatprep.subr.mxu0 0.0
    %235 = vmatpush2.msra.mxu0 0.0
    %236 = vmatprep.subr.mxu0 0.0
    %237 = vmatpush2.msra.mxu0 0.0
    %238 = vmatprep.subr.mxu0 0.0
    %239 = vmatpush2.msra.mxu0 0.0
    %240 = vmatprep.subr.mxu0 0.0
    %241 = vmatpush2.msra.mxu0 0.0
    %242 = vmatprep.subr.mxu0 0.0
    %243 = vmatpush2.msra.mxu0 0.0
    %244 = vmatprep.subr.mxu0 0.0
    %245 = vmatpush2.msra.mxu0 0.0
    %246 = vmatprep.subr.mxu0 0.0
    %247 = vmatpush2.msra.mxu0 0.0
    %248 = vmatprep.subr.mxu0 0.0
    %249 = vmatpush2.msra.mxu0 0.0
    %250 = vmatprep.subr.mxu0 0.0
    %251 = vmatpush2.msra.mxu0 0.0
    %252 = vmatprep.subr.mxu0 0.0
    %253 = vmatpush2.msra.mxu0 0.0
    %254 = vmatprep.mubr.f32.mxu0 0.0
    %255 = vmatmul.mubr.f32.gmra.mxu0 %v185
    %v256 = vpop.f32.mrf.mxu0
    %v257 = vadd.f32 0.0, %v256
    %v258 = vpop.f32.mrf.mxu0
    %259 = vmatprep.mubr.f32.mxu0 0.0
    %260 = vmatmul.mubr.f32.gmra.mxu0 %v188
    %v261 = vpop.f32.mrf.mxu0
    %v262 = vadd.f32 0.0, %v261
    %v263 = vpop.f32.mrf.mxu0
    %264 = vdwg.mxu0
    %v265 = vadd.f32 %v173, %v257
    %v266 = vadd.f32 %v174, %v262
    %267 = vst [vmem:[#allocation2] sm:$0xff] %v265
    %268 = vst [vmem:[#allocation2 + $0x8] sm:$0xff] %v266
    // Predicated region
    $region38: #{tpu_custom_call.1} parent=1 // pred_check
      %p269 = pneg %p62
    $region39: #{tpu_custom_call.1} parent=1 // pred_check_branch
      %271 = sbr.rel (%p269) target = $region41
    $region40: #{tpu_custom_call.1} parent=1 // pred_region
      %v272 = vld [vmem:[#allocation2] sm:$0xff]
      %v273 = vld [vmem:[#allocation2 + $0x8] sm:$0xff]
      %v274 = vld [vmem:[%s4] sm:$0x1]
      %v276 = vlaneseq
      %v277 = vshrl.u32 %v276, 7
      %v278 = vsub.s32 0, %v277
      %v279 = vrot.slane %v274, %v278
      %v281 = vadd.f32 %v272, %v279
      %v282 = vadd.f32 %v273, %v279
      %283 = vst [vmem:[#allocation9] sm:$0xff] %v281
      %284 = vst [vmem:[#allocation9 + $0x8] sm:$0xff] %v282
    $region41: #{tpu_custom_call.1} parent=1 // pred_fallthru
      _
    // Predicated region
    $region42: #{tpu_custom_call.1} parent=1 // pred_check
      _
    $region43: #{tpu_custom_call.1} parent=1 // pred_check_branch
      %286 = sbr.rel (0) target = $region45
    $region44: #{tpu_custom_call.1} parent=1 // pred_region
      %s288 = ssub.s32 256, 256
      %289 = vsyncadd [#allocation5], %s288
      %s290 = sshll.u32 [#allocation9], 4
      %s291 = int_to_ptr.vmem [resolvable:$true] %s290
      %296 = dma.vmem_to_hbm [thread:$0]  %s291, 256, %s5, [#allocation5], 128, 128, 8
    $region45: #{tpu_custom_call.1} parent=1 // pred_fallthru
      _
    // Predicated region
    $region46: #{tpu_custom_call.1} parent=1 // pred_check
      _
    $region47: #{tpu_custom_call.1} parent=1 // pred_check_branch
      %298 = sbr.rel (0) target = $region49
    $region48: #{tpu_custom_call.1} parent=1 // pred_region
      %299 = dma.done [#allocation5], 256
    $region49: #{tpu_custom_call.1} parent=1 // pred_fallthru
      _
    %300 = vsyncpa [#allocation4], 1
    %301 = vsyncpa [#allocation7], 1
    %302 = vsyncpa [#allocation5], 1

</llo_original>
